<compile_context>
chip_gen: v7x
topology: tpu7x:2x2x1
jax: 0.10.0
libtpu: 0.0.40
codegen_flags: <defaults>
</compile_context>

<pallas_src>
import functools

import jax
import jax.numpy as jnp
from jax.experimental import pallas as pl
from jax.experimental.pallas import tpu as pltpu


def _mhsa_kernel(x_ref, wq_ref, wk_ref, wv_ref, wp_ref, bp_ref, o_ref,
                 acc_ref, *, scale):
    """One (batch, head) grid step of fused multi-head self-attention."""
    h = pl.program_id(1)

    @pl.when(h == 0)
    def _init():
        acc_ref[...] = jnp.zeros_like(acc_ref)

    xb = x_ref[0]                                                     # (N, C)

    # ---- per-head q / k / v projections: (N, C) @ (C, Dh), f32 accumulate ----
    q = jnp.dot(xb, wq_ref[0], preferred_element_type=jnp.float32)    # (N, Dh)
    k = jnp.dot(xb, wk_ref[0], preferred_element_type=jnp.float32)    # (N, Dh)
    v = jnp.dot(xb, wv_ref[0], preferred_element_type=jnp.float32)    # (N, Dh)

    # ---- attention scores q @ k^T (rhs-transposed dot, no explicit transpose) ----
    s = jax.lax.dot_general(q, k, (((1,), (1,)), ((), ())),
                            preferred_element_type=jnp.float32) * scale  # (N, N)

    # ---- numerically stable softmax over keys (attn_drop p=0 -> identity) ----
    s = s - jnp.max(s, axis=-1, keepdims=True)
    p = jnp.exp(s)
    p = p / jnp.sum(p, axis=-1, keepdims=True)

    # ---- per-head attention output: (N, N) @ (N, Dh) ----
    head = jnp.dot(p.astype(v.dtype), v, preferred_element_type=jnp.float32)

    # ---- fold the output projection into the head reduction ----
    part = jnp.dot(head.astype(wp_ref.dtype), wp_ref[0],
                   preferred_element_type=jnp.float32)                # (N, C)
    acc_ref[...] += part

    @pl.when(h == pl.num_programs(1) - 1)
    def _finalize():
        # proj bias added once per batch block; proj_drop(p=0) -> identity.
        o_ref[0] = (acc_ref[...] + bp_ref[...]).astype(o_ref.dtype)


def _vmem_limit_bytes(N, C, Dh, x_dtype, w_dtype, out_dtype):
    itm = lambda dt: jnp.dtype(dt).itemsize
    dbl = 2  # BlockSpec pipeline double-buffers every input/output block
    needed = (
        dbl * N * C * itm(x_dtype)               # x block
        + dbl * 3 * C * Dh * itm(w_dtype)        # Wq/Wk/Wv per-head panels
        + dbl * Dh * C * itm(w_dtype)            # Wproj per-head panel
        + dbl * C * itm(w_dtype)                 # proj bias
        + dbl * N * C * itm(out_dtype)           # output block
        + N * C * 4                              # f32 accumulator scratch
        + (3 * N * Dh + 2 * N * N + N * C) * 4   # in-kernel temporaries
    )
    # generous margin for (8,128) tile padding + compiler scratch, capped so the
    # same setting also fits v7x's 64 MiB physical VMEM.
    return int(min(max(2 * needed + (8 << 20), 16 << 20), 64 << 20))


@functools.partial(jax.jit, static_argnames=("num_heads", "scale"))
def mhsa_pallas(x, w_qkv, w_proj, b_proj, *, num_heads, scale=None):
    """Multi-head self-attention matching MHSA.forward (eval / dropout p=0).

    x      : (B, N, C)
    w_qkv  : (C, 3C)  torch qkv weight transposed to (in, out); qkv_bias=False
    w_proj : (C, C)   torch proj weight transposed to (in, out)
    b_proj : (C,)
    """
    B, N, C = x.shape
    H = num_heads
    assert C % H == 0, "dim must be divisible by num_heads"
    Dh = C // H
    if scale is None:
        scale = Dh ** (-0.5)

    # Split Wqkv / Wproj into per-head panels once, outside the kernel.
    #   q_h = x @ Wqkv[:, h*Dh:(h+1)*Dh]   (first C columns of Wqkv), etc.
    wq = w_qkv[:, 0 * C:1 * C].reshape(C, H, Dh).transpose(1, 0, 2)   # (H, C, Dh)
    wk = w_qkv[:, 1 * C:2 * C].reshape(C, H, Dh).transpose(1, 0, 2)   # (H, C, Dh)
    wv = w_qkv[:, 2 * C:3 * C].reshape(C, H, Dh).transpose(1, 0, 2)   # (H, C, Dh)
    wp = w_proj.reshape(H, Dh, C)                                     # (H, Dh, C)
    bp = b_proj.reshape(1, C)

    kernel = functools.partial(_mhsa_kernel, scale=float(scale))

    return pl.pallas_call(
        kernel,
        out_shape=jax.ShapeDtypeStruct((B, N, C), x.dtype),
        grid_spec=pltpu.PrefetchScalarGridSpec(
            num_scalar_prefetch=0,
            grid=(B, H),  # head axis last: it is the reduction axis
            in_specs=[
                pl.BlockSpec((1, N, C), lambda b, h: (b, 0, 0)),    # x[b]
                pl.BlockSpec((1, C, Dh), lambda b, h: (h, 0, 0)),   # Wq[h]
                pl.BlockSpec((1, C, Dh), lambda b, h: (h, 0, 0)),   # Wk[h]
                pl.BlockSpec((1, C, Dh), lambda b, h: (h, 0, 0)),   # Wv[h]
                pl.BlockSpec((1, Dh, C), lambda b, h: (h, 0, 0)),   # Wproj[h]
                pl.BlockSpec((1, C), lambda b, h: (0, 0)),          # proj bias
            ],
            out_specs=pl.BlockSpec((1, N, C), lambda b, h: (b, 0, 0)),
            scratch_shapes=[pltpu.VMEM((N, C), jnp.float32)],       # accumulator
        ),
        compiler_params=pltpu.CompilerParams(
            dimension_semantics=("parallel", "arbitrary"),
            vmem_limit_bytes=_vmem_limit_bytes(N, C, Dh, x.dtype,
                                               w_qkv.dtype, x.dtype),
        ),
    )(x, wq, wk, wv, wp, bp)


def _reference(x, w_qkv, w_proj, b_proj, num_heads, scale=None):
    """Pure-JAX mirror of MHSA.forward."""
    B, N, C = x.shape
    H = num_heads
    Dh = C // H
    if scale is None:
        scale = Dh ** (-0.5)
    qkv = (x @ w_qkv).reshape(B, N, 3, H, Dh).transpose(2, 0, 3, 1, 4)
    q, k, v = qkv[0], qkv[1], qkv[2]                    # (B, H, N, Dh)
    attn = (q @ jnp.swapaxes(k, -1, -2)) * scale
    attn = jax.nn.softmax(attn, axis=-1)
    out = (attn @ v).transpose(0, 2, 1, 3).reshape(B, N, C)
    return out @ w_proj + b_proj


if __name__ == "__main__":
    # Small shapes consistent with the module: (B, N, C) tokens, C % heads == 0.
    B, N = 2, 16
    dim = 32
    num_heads = 4          # head_dim = 8, scale = 8**-0.5

    key = jax.random.PRNGKey(0)
    kx, kqkv, kp, kb = jax.random.split(key, 4)

    x = jax.random.normal(kx, (B, N, dim), dtype=jnp.float32)

    # Deterministic init (uniform, torch.nn.Linear-like scale), stored as
    # (in, out) so the kernel does plain x @ W.  qkv_bias=False (module default).
    lim = 1.0 / jnp.sqrt(dim)
    w_qkv = jax.random.uniform(kqkv, (dim, 3 * dim), minval=-lim, maxval=lim,
                               dtype=jnp.float32)
    w_proj = jax.random.uniform(kp, (dim, dim), minval=-lim, maxval=lim,
                                dtype=jnp.float32)
    b_proj = jax.random.uniform(kb, (dim,), minval=-lim, maxval=lim,
                                dtype=jnp.float32)

    out = mhsa_pallas(x, w_qkv, w_proj, b_proj, num_heads=num_heads)
    out = jax.block_until_ready(out)

    ref = _reference(x, w_qkv, w_proj, b_proj, num_heads)
    assert out.shape == (B, N, dim)
    assert jnp.allclose(out, ref, atol=1e-4, rtol=1e-4), "mismatch vs reference"

    print("KERNEL_OK")
</pallas_src>

<mosaic_0001>
module attributes {stable_mosaic.version = 11 : i64} {
  func.func @_mhsa_kernel(%arg0: i32, %arg1: i32, %arg2: memref<1x16x32xf32, #tpu.memory_space<vmem>>, %arg3: memref<1x32x8xf32, #tpu.memory_space<vmem>>, %arg4: memref<1x32x8xf32, #tpu.memory_space<vmem>>, %arg5: memref<1x32x8xf32, #tpu.memory_space<vmem>>, %arg6: memref<1x8x32xf32, #tpu.memory_space<vmem>>, %arg7: memref<1x32xf32, #tpu.memory_space<vmem>>, %arg8: memref<1x16x32xf32, #tpu.memory_space<vmem>>, %arg9: memref<16x32xf32, #tpu.memory_space<vmem>>) attributes {dimension_semantics = [#tpu.dimension_semantics<parallel>, #tpu.dimension_semantics<arbitrary>], iteration_bounds = array<i64: 2, 4>, scalar_prefetch = 0 : i64, scratch_operands = 1 : i64, tpu.core_type = #tpu.core_type<tc>, window_params = [{transform_indices = @transform_0, window_bounds = array<i64: 1, 16, 32>}, {transform_indices = @transform_1, window_bounds = array<i64: 1, 32, 8>}, {transform_indices = @transform_2, window_bounds = array<i64: 1, 32, 8>}, {transform_indices = @transform_3, window_bounds = array<i64: 1, 32, 8>}, {transform_indices = @transform_4, window_bounds = array<i64: 1, 8, 32>}, {pipeline_mode = #tpu.pipeline_mode<synchronous>, transform_indices = @transform_5, window_bounds = array<i64: 1, 32>}, {transform_indices = @transform_6, window_bounds = array<i64: 1, 16, 32>}]} {
    %c0_i32 = arith.constant 0 : i32
    %0 = arith.cmpi eq, %arg1, %c0_i32 : i32
    %1 = arith.extui %0 : i1 to i32
    %c0_i32_0 = arith.constant 0 : i32
    %2 = arith.cmpi ne, %1, %c0_i32_0 : i32
    scf.if %2 {
      %cst_28 = arith.constant 0.000000e+00 : f32
      %36 = vector.broadcast %cst_28 : f32 to vector<16x32xf32>
      %c0_29 = arith.constant 0 : index
      %c0_30 = arith.constant 0 : index
      %37 = vector.load %arg9[%c0_29, %c0_30] : memref<16x32xf32, #tpu.memory_space<vmem>>, vector<16x32xf32>
      tpu.vector_store %arg9[%c0_29, %c0_30], %36 {strides = array<i32>} : memref<16x32xf32, #tpu.memory_space<vmem>>, vector<16x32xf32>,
    } else {
    }
    %c0 = arith.constant 0 : index
    %c0_1 = arith.constant 0 : index
    %c0_2 = arith.constant 0 : index
    %3 = vector.load %arg2[%c0, %c0_1, %c0_2] : memref<1x16x32xf32, #tpu.memory_space<vmem>>, vector<1x16x32xf32>
    %4 = vector.shape_cast %3 : vector<1x16x32xf32> to vector<16x32xf32>
    %c0_3 = arith.constant 0 : index
    %c0_4 = arith.constant 0 : index
    %c0_5 = arith.constant 0 : index
    %5 = vector.load %arg3[%c0_3, %c0_4, %c0_5] : memref<1x32x8xf32, #tpu.memory_space<vmem>>, vector<1x32x8xf32>
    %6 = vector.shape_cast %5 : vector<1x32x8xf32> to vector<32x8xf32>
    %cst = arith.constant dense<0.000000e+00> : vector<16x8xf32>
    %7 = tpu.matmul %4, %6, %cst {dimension_numbers = #tpu.dot_dimension_numbers<[1], [0], [0], [1], [0, 0, 1, 1], [], []>} : vector<16x32xf32>, vector<32x8xf32>, vector<16x8xf32> -> vector<16x8xf32>
    %c0_6 = arith.constant 0 : index
    %c0_7 = arith.constant 0 : index
    %c0_8 = arith.constant 0 : index
    %8 = vector.load %arg4[%c0_6, %c0_7, %c0_8] : memref<1x32x8xf32, #tpu.memory_space<vmem>>, vector<1x32x8xf32>
    %9 = vector.shape_cast %8 : vector<1x32x8xf32> to vector<32x8xf32>
    %cst_9 = arith.constant dense<0.000000e+00> : vector<16x8xf32>
    %10 = tpu.matmul %4, %9, %cst_9 {dimension_numbers = #tpu.dot_dimension_numbers<[1], [0], [0], [1], [0, 0, 1, 1], [], []>} : vector<16x32xf32>, vector<32x8xf32>, vector<16x8xf32> -> vector<16x8xf32>
    %c0_10 = arith.constant 0 : index
    %c0_11 = arith.constant 0 : index
    %c0_12 = arith.constant 0 : index
    %11 = vector.load %arg5[%c0_10, %c0_11, %c0_12] : memref<1x32x8xf32, #tpu.memory_space<vmem>>, vector<1x32x8xf32>
    %12 = vector.shape_cast %11 : vector<1x32x8xf32> to vector<32x8xf32>
    %cst_13 = arith.constant dense<0.000000e+00> : vector<16x8xf32>
    %13 = tpu.matmul %4, %12, %cst_13 {dimension_numbers = #tpu.dot_dimension_numbers<[1], [0], [0], [1], [0, 0, 1, 1], [], []>} : vector<16x32xf32>, vector<32x8xf32>, vector<16x8xf32> -> vector<16x8xf32>
    %cst_14 = arith.constant dense<0.000000e+00> : vector<16x16xf32>
    %14 = tpu.matmul %7, %10, %cst_14 {dimension_numbers = #tpu.dot_dimension_numbers<[1], [1], [0], [0], [0, 0, 1, 0], [], []>} : vector<16x8xf32>, vector<16x8xf32>, vector<16x16xf32> -> vector<16x16xf32>
    %cst_15 = arith.constant 0.353553385 : f32
    %15 = vector.broadcast %cst_15 : f32 to vector<16x16xf32>
    %16 = arith.mulf %14, %15 : vector<16x16xf32>
    %cst_16 = arith.constant dense<0xFF800000> : vector<16xf32>
    %17 = vector.multi_reduction <maximumf>, %16, %cst_16 [1] : vector<16x16xf32> to vector<16xf32>
    %18 = vector.shape_cast %17 : vector<16xf32> to vector<16x1xf32>
    %19 = vector.broadcast %18 : vector<16x1xf32> to vector<16x16xf32>
    %20 = arith.subf %16, %19 : vector<16x16xf32>
    %21 = math.exp %20 : vector<16x16xf32>
    %cst_17 = arith.constant dense<0.000000e+00> : vector<16xf32>
    %22 = vector.multi_reduction <add>, %21, %cst_17 [1] : vector<16x16xf32> to vector<16xf32>
    %23 = vector.shape_cast %22 : vector<16xf32> to vector<16x1xf32>
    %24 = vector.broadcast %23 : vector<16x1xf32> to vector<16x16xf32>
    %25 = arith.divf %21, %24 : vector<16x16xf32>
    %cst_18 = arith.constant dense<0.000000e+00> : vector<16x8xf32>
    %26 = tpu.matmul %25, %13, %cst_18 {dimension_numbers = #tpu.dot_dimension_numbers<[1], [0], [0], [1], [0, 0, 1, 1], [], []>} : vector<16x16xf32>, vector<16x8xf32>, vector<16x8xf32> -> vector<16x8xf32>
    %c0_19 = arith.constant 0 : index
    %c0_20 = arith.constant 0 : index
    %c0_21 = arith.constant 0 : index
    %27 = vector.load %arg6[%c0_19, %c0_20, %c0_21] : memref<1x8x32xf32, #tpu.memory_space<vmem>>, vector<1x8x32xf32>
    %28 = vector.shape_cast %27 : vector<1x8x32xf32> to vector<8x32xf32>
    %cst_22 = arith.constant dense<0.000000e+00> : vector<16x32xf32>
    %29 = tpu.matmul %26, %28, %cst_22 {dimension_numbers = #tpu.dot_dimension_numbers<[1], [0], [0], [1], [0, 0, 1, 1], [], []>} : vector<16x8xf32>, vector<8x32xf32>, vector<16x32xf32> -> vector<16x32xf32>
    %c0_23 = arith.constant 0 : index
    %c0_24 = arith.constant 0 : index
    %30 = vector.load %arg9[%c0_23, %c0_24] : memref<16x32xf32, #tpu.memory_space<vmem>>, vector<16x32xf32>
    %31 = arith.addf %30, %29 : vector<16x32xf32>
    %c0_25 = arith.constant 0 : index
    %c0_26 = arith.constant 0 : index
    %32 = vector.load %arg9[%c0_25, %c0_26] : memref<16x32xf32, #tpu.memory_space<vmem>>, vector<16x32xf32>
    tpu.vector_store %arg9[%c0_25, %c0_26], %31 {strides = array<i32>} : memref<16x32xf32, #tpu.memory_space<vmem>>, vector<16x32xf32>,
    %c3_i32 = arith.constant 3 : i32
    %33 = arith.cmpi eq, %arg1, %c3_i32 : i32
    %34 = arith.extui %33 : i1 to i32
    %c0_i32_27 = arith.constant 0 : i32
    %35 = arith.cmpi ne, %34, %c0_i32_27 : i32
    scf.if %35 {
      %c0_28 = arith.constant 0 : index
      %c0_29 = arith.constant 0 : index
      %36 = vector.load %arg9[%c0_28, %c0_29] : memref<16x32xf32, #tpu.memory_space<vmem>>, vector<16x32xf32>
      %c0_30 = arith.constant 0 : index
      %c0_31 = arith.constant 0 : index
      %37 = vector.load %arg7[%c0_30, %c0_31] : memref<1x32xf32, #tpu.memory_space<vmem>>, vector<1x32xf32>
      %38 = vector.broadcast %37 : vector<1x32xf32> to vector<16x32xf32>
      %39 = arith.addf %36, %38 : vector<16x32xf32>
      %c0_32 = arith.constant 0 : index
      %c0_33 = arith.constant 0 : index
      %c0_34 = arith.constant 0 : index
      %40 = vector.load %arg8[%c0_32, %c0_33, %c0_34] : memref<1x16x32xf32, #tpu.memory_space<vmem>>, vector<1x16x32xf32>
      %41 = vector.shape_cast %40 : vector<1x16x32xf32> to vector<16x32xf32>
      %42 = vector.shape_cast %39 : vector<16x32xf32> to vector<1x16x32xf32>
      tpu.vector_store %arg8[%c0_32, %c0_33, %c0_34], %42 {strides = array<i32>} : memref<1x16x32xf32, #tpu.memory_space<vmem>>, vector<1x16x32xf32>,
    } else {
    }
    return
  }
  func.func @transform_0(%arg0: i32, %arg1: i32) -> (i32, i32, i32) {
    %c0_i32 = arith.constant 0 : i32
    %c0_i32_0 = arith.constant 0 : i32
    %c0_i32_1 = arith.constant 0 : i32
    return %arg0, %c0_i32, %c0_i32_0 : i32, i32, i32
  }
  func.func @transform_1(%arg0: i32, %arg1: i32) -> (i32, i32, i32) {
    %c0_i32 = arith.constant 0 : i32
    %c0_i32_0 = arith.constant 0 : i32
    %c0_i32_1 = arith.constant 0 : i32
    return %arg1, %c0_i32, %c0_i32_0 : i32, i32, i32
  }
  func.func @transform_2(%arg0: i32, %arg1: i32) -> (i32, i32, i32) {
    %c0_i32 = arith.constant 0 : i32
    %c0_i32_0 = arith.constant 0 : i32
    %c0_i32_1 = arith.constant 0 : i32
    return %arg1, %c0_i32, %c0_i32_0 : i32, i32, i32
  }
  func.func @transform_3(%arg0: i32, %arg1: i32) -> (i32, i32, i32) {
    %c0_i32 = arith.constant 0 : i32
    %c0_i32_0 = arith.constant 0 : i32
    %c0_i32_1 = arith.constant 0 : i32
    return %arg1, %c0_i32, %c0_i32_0 : i32, i32, i32
  }
  func.func @transform_4(%arg0: i32, %arg1: i32) -> (i32, i32, i32) {
    %c0_i32 = arith.constant 0 : i32
    %c0_i32_0 = arith.constant 0 : i32
    %c0_i32_1 = arith.constant 0 : i32
    return %arg1, %c0_i32, %c0_i32_0 : i32, i32, i32
  }
  func.func @transform_5(%arg0: i32, %arg1: i32) -> (i32, i32) {
    %c0_i32 = arith.constant 0 : i32
    %c0_i32_0 = arith.constant 0 : i32
    %c0_i32_1 = arith.constant 0 : i32
    return %c0_i32, %c0_i32_0 : i32, i32
  }
  func.func @transform_6(%arg0: i32, %arg1: i32) -> (i32, i32, i32) {
    %c0_i32 = arith.constant 0 : i32
    %c0_i32_0 = arith.constant 0 : i32
    %c0_i32_1 = arith.constant 0 : i32
    return %arg0, %c0_i32, %c0_i32_0 : i32, i32, i32
  }
}

</mosaic_0001>

<llo_original>
// kernel: mhsa_pallas.1
$region0: #{mhsa_pallas.1}
  #allocation0 [shape = 'u32[]', space=smem, size = 0x4, offset = 0x4, fixed_abs, tag = 'smem constant byte address 0x4 - core index']
  #allocation1 [shape = 'u32[144,128]{1,0:T(1,128)}', space=vmem, size = 0x12000, scoped, tag = 'internal scratch']
  #allocation2 [shape = 'f32[16,32]{1,0:T(8,128)}', space=vmem, size = 0x2000, scoped, tag = 'scratch operand']
  %s0 = inlined_call_operand.vmem [shape: f32[2,16,32], index: 0, kind: input, shape index: {}]
  %s1 = inlined_call_operand.vmem [shape: f32[4,32,8], index: 1, kind: input, shape index: {}]
  %s2 = inlined_call_operand.vmem [shape: f32[4,32,8], index: 2, kind: input, shape index: {}]
  %s3 = inlined_call_operand.vmem [shape: f32[4,32,8], index: 3, kind: input, shape index: {}]
  %s4 = inlined_call_operand.vmem [shape: f32[4,8,32], index: 4, kind: input, shape index: {}]
  %s5 = inlined_call_operand.vmem [shape: f32[1,32], index: 5, kind: input, shape index: {}]
  %s6 = inlined_call_operand.hbm [shape: f32[2,16,32], index: 6, kind: output, shape index: {}]
  %s7 = sld [smem:[#allocation0]]
  $region65: #{mhsa_pallas.1} parent=0
    _
  %s9 = ssub.s32 1, %s7
  %s10 = scalar_select 0, %s9, %s7
  $region1: #{mhsa_pallas.1} parent=0
    #allocation3 [shape = 'u8[16384]{0}', space=vmem, size = 0x4000, scoped, tag = 'output window, operand 0']
    #allocation4 [shape = 's32[2]{0}', space=sflag, size = 0x8, scoped, tag = 'scoped memory for mhsa_pallas.1']
    %11 = vsyncpa [#allocation4], 0
    %s12 = scalar_lea.sflag [#allocation4], 1
    %13 = vsyncpa %s12, 0
    loop: start=0, step=1, limit=10
    $region2: #{mhsa_pallas.1} parent=1 // loop_pre_header
      _
    $region3: #{mhsa_pallas.1} parent=1 // loop_header
      %s15 = sphi 0, %s19
      %p16 = scmp.ge.s32.totalorder %s15, 10
      %s22 = sphi 0, %s34
      %s23 = sphi 0, %s30
      %s24 = sphi 0, %s22
      %s25 = sphi 0, %s23
      %s26 = sphi 0, %s24
      %s27 = sphi 0, %s25
      %s37 = sphi 0, %s39
      %s40 = sphi 0, %s37
      %s41 = sphi 0, %s40
      %s57 = sphi 0, %s41
      %s63 = sphi 0, %s65
      %s66 = sphi 0, %s63
      %s67 = sphi 0, %s66
      %s83 = sphi 0, %s67
      %s89 = sphi 0, %s91
      %s92 = sphi 0, %s89
      %s93 = sphi 0, %s92
      %s109 = sphi 0, %s93
      %s115 = sphi 0, %s117
      %s118 = sphi 0, %s115
      %s119 = sphi 0, %s118
      %s135 = sphi 0, %s119
      %s141 = sphi 0, %s143
      %s144 = sphi 0, %s141
      %s145 = sphi 0, %s144
      %s161 = sphi 0, %s145
      %s165 = sphi 0, %s165
      %s167 = sphi 0, %s165
      %s168 = sphi 0, %s167
      %s182 = sphi 0, %s168
      %s188 = sphi 0, %s190
      %s191 = sphi 0, %s188
      %s192 = sphi 0, %s191
      %s208 = sphi 0, %s192
    $region4: #{mhsa_pallas.1} parent=1 // loop_header_branch
      %18 = sbr.rel (%p16) target = $region8
    $region5: #{mhsa_pallas.1} parent=1 // loop_body
      %s20 = ssub.s32 %s15, 1
      %s21 = ssub.s32 %s15, 2
      %s28 = sadd.s32 1, %s23
      %p29 = scmp.ge.s32.totalorder %s28, 4
      %s30 = scalar_select %p29, 0, %s28
      %s31 = sadd.s32 1, %s22
      %s32 = scalar_select %p29, %s31, %s22
      %p33 = scmp.ge.s32.totalorder %s32, 2
      %s34 = scalar_select %p33, 0, %s32
      %s35 = ssub.s32 %s22, %s34
      %p36 = scmp.eq.s32.totalorder %s35, 0
      %s38 = sadd.s32 %s37, 1
      %s39 = scalar_select %p36, %s37, %s38
      %p42 = pneg %p36
      %p43 = scmp.eq.s32.totalorder %s15, 7
      %p44 = por %p42, %p43
      %p45 = scmp.ne.s32.totalorder %s37, %s40
      %p46 = scmp.eq.s32.totalorder %s15, 0
      %p47 = por %p45, %p46
      %p48 = scmp.ne.s32.totalorder %s37, %s40
      %p49 = scmp.eq.s32.totalorder %s20, 7
      %p50 = por %p48, %p49
      %p51 = scmp.ne.s32.totalorder %s40, %s41
      %p52 = scmp.eq.s32.totalorder %s20, 0
      %p53 = por %p51, %p52
      %p54 = scmp.ne.s32.totalorder %s40, %s41
      %p55 = scmp.eq.s32.totalorder %s21, 7
      %p56 = por %p54, %p55
      %p58 = scmp.ne.s32.totalorder %s41, %s57
      %p59 = scmp.eq.s32.totalorder %s21, 0
      %p60 = por %p58, %p59
      %s61 = ssub.s32 %s23, %s30
      %p62 = scmp.eq.s32.totalorder %s61, 0
      %s64 = sadd.s32 %s63, 1
      %s65 = scalar_select %p62, %s63, %s64
      %p68 = pneg %p62
      %p69 = scmp.eq.s32.totalorder %s15, 7
      %p70 = por %p68, %p69
      %p71 = scmp.ne.s32.totalorder %s63, %s66
      %p72 = scmp.eq.s32.totalorder %s15, 0
      %p73 = por %p71, %p72
      %p74 = scmp.ne.s32.totalorder %s63, %s66
      %p75 = scmp.eq.s32.totalorder %s20, 7
      %p76 = por %p74, %p75
      %p77 = scmp.ne.s32.totalorder %s66, %s67
      %p78 = scmp.eq.s32.totalorder %s20, 0
      %p79 = por %p77, %p78
      %p80 = scmp.ne.s32.totalorder %s66, %s67
      %p81 = scmp.eq.s32.totalorder %s21, 7
      %p82 = por %p80, %p81
      %p84 = scmp.ne.s32.totalorder %s67, %s83
      %p85 = scmp.eq.s32.totalorder %s21, 0
      %p86 = por %p84, %p85
      %s87 = ssub.s32 %s23, %s30
      %p88 = scmp.eq.s32.totalorder %s87, 0
      %s90 = sadd.s32 %s89, 1
      %s91 = scalar_select %p88, %s89, %s90
      %p94 = pneg %p88
      %p95 = scmp.eq.s32.totalorder %s15, 7
      %p96 = por %p94, %p95
      %p97 = scmp.ne.s32.totalorder %s89, %s92
      %p98 = scmp.eq.s32.totalorder %s15, 0
      %p99 = por %p97, %p98
      %p100 = scmp.ne.s32.totalorder %s89, %s92
      %p101 = scmp.eq.s32.totalorder %s20, 7
      %p102 = por %p100, %p101
      %p103 = scmp.ne.s32.totalorder %s92, %s93
      %p104 = scmp.eq.s32.totalorder %s20, 0
      %p105 = por %p103, %p104
      %p106 = scmp.ne.s32.totalorder %s92, %s93
      %p107 = scmp.eq.s32.totalorder %s21, 7
      %p108 = por %p106, %p107
      %p110 = scmp.ne.s32.totalorder %s93, %s109
      %p111 = scmp.eq.s32.totalorder %s21, 0
      %p112 = por %p110, %p111
      %s113 = ssub.s32 %s23, %s30
      %p114 = scmp.eq.s32.totalorder %s113, 0
      %s116 = sadd.s32 %s115, 1
      %s117 = scalar_select %p114, %s115, %s116
      %p120 = pneg %p114
      %p121 = scmp.eq.s32.totalorder %s15, 7
      %p122 = por %p120, %p121
      %p123 = scmp.ne.s32.totalorder %s115, %s118
      %p124 = scmp.eq.s32.totalorder %s15, 0
      %p125 = por %p123, %p124
      %p126 = scmp.ne.s32.totalorder %s115, %s118
      %p127 = scmp.eq.s32.totalorder %s20, 7
      %p128 = por %p126, %p127
      %p129 = scmp.ne.s32.totalorder %s118, %s119
      %p130 = scmp.eq.s32.totalorder %s20, 0
      %p131 = por %p129, %p130
      %p132 = scmp.ne.s32.totalorder %s118, %s119
      %p133 = scmp.eq.s32.totalorder %s21, 7
      %p134 = por %p132, %p133
      %p136 = scmp.ne.s32.totalorder %s119, %s135
      %p137 = scmp.eq.s32.totalorder %s21, 0
      %p138 = por %p136, %p137
      %s139 = ssub.s32 %s23, %s30
      %p140 = scmp.eq.s32.totalorder %s139, 0
      %s142 = sadd.s32 %s141, 1
      %s143 = scalar_select %p140, %s141, %s142
      %p146 = pneg %p140
      %p147 = scmp.eq.s32.totalorder %s15, 7
      %p148 = por %p146, %p147
      %p149 = scmp.ne.s32.totalorder %s141, %s144
      %p150 = scmp.eq.s32.totalorder %s15, 0
      %p151 = por %p149, %p150
      %p152 = scmp.ne.s32.totalorder %s141, %s144
      %p153 = scmp.eq.s32.totalorder %s20, 7
      %p154 = por %p152, %p153
      %p155 = scmp.ne.s32.totalorder %s144, %s145
      %p156 = scmp.eq.s32.totalorder %s20, 0
      %p157 = por %p155, %p156
      %p158 = scmp.ne.s32.totalorder %s144, %s145
      %p159 = scmp.eq.s32.totalorder %s21, 7
      %p160 = por %p158, %p159
      %p162 = scmp.ne.s32.totalorder %s145, %s161
      %p163 = scmp.eq.s32.totalorder %s21, 0
      %p164 = por %p162, %p163
      %s166 = sadd.s32 %s165, 1
      %p169 = scmp.eq.s32.totalorder %s15, 7
      %p170 = scmp.ne.s32.totalorder %s165, %s167
      %p171 = scmp.eq.s32.totalorder %s15, 0
      %p172 = por %p170, %p171
      %p173 = scmp.ne.s32.totalorder %s165, %s167
      %p174 = scmp.eq.s32.totalorder %s20, 7
      %p175 = por %p173, %p174
      %p176 = scmp.ne.s32.totalorder %s167, %s168
      %p177 = scmp.eq.s32.totalorder %s20, 0
      %p178 = por %p176, %p177
      %p179 = scmp.ne.s32.totalorder %s167, %s168
      %p180 = scmp.eq.s32.totalorder %s21, 7
      %p181 = por %p179, %p180
      %p183 = scmp.ne.s32.totalorder %s168, %s182
      %p184 = scmp.eq.s32.totalorder %s21, 0
      %p185 = por %p183, %p184
      %s186 = ssub.s32 %s22, %s34
      %p187 = scmp.eq.s32.totalorder %s186, 0
      %s189 = sadd.s32 %s188, 1
      %s190 = scalar_select %p187, %s188, %s189
      %p193 = pneg %p187
      %p194 = scmp.eq.s32.totalorder %s15, 7
      %p195 = por %p193, %p194
      %p196 = scmp.ne.s32.totalorder %s188, %s191
      %p197 = scmp.eq.s32.totalorder %s15, 0
      %p198 = por %p196, %p197
      %p199 = scmp.ne.s32.totalorder %s188, %s191
      %p200 = scmp.eq.s32.totalorder %s20, 7
      %p201 = por %p199, %p200
      %p202 = scmp.ne.s32.totalorder %s191, %s192
      %p203 = scmp.eq.s32.totalorder %s20, 0
      %p204 = por %p202, %p203
      %p205 = scmp.ne.s32.totalorder %s191, %s192
      %p206 = scmp.eq.s32.totalorder %s21, 7
      %p207 = por %p205, %p206
      %p209 = scmp.ne.s32.totalorder %s192, %s208
      %p210 = scmp.eq.s32.totalorder %s21, 0
      %p211 = por %p209, %p210
      %p212 = scmp.le.s32.totalorder 1, %s15
      %p213 = scmp.lt.s32.totalorder %s15, 9
      %p214 = pnand %p212, %p213
      %p215 = pneg %p214
      // Predicated region
      $region9: #{mhsa_pallas.1} parent=5 // pred_check
        _
      $region10: #{mhsa_pallas.1} parent=5 // pred_check_branch
        %217 = sbr.rel (%p214) target = $region12
      $region11: #{mhsa_pallas.1} parent=5 // pred_region
        %s218 = ssub.s32 %s15, 1
        // Predicated region
        $region13: #{mhsa_pallas.1} parent=11 // pred_check
          %p219 = pneg %p178
        $region14: #{mhsa_pallas.1} parent=11 // pred_check_branch
          %221 = sbr.rel (%p219) target = $region16
        $region15: #{mhsa_pallas.1} parent=11 // pred_region
          _
        $region16: #{mhsa_pallas.1} parent=11 // pred_fallthru
          _
      $region12: #{mhsa_pallas.1} parent=5 // pred_fallthru
        _
      %p222 = scmp.lt.s32.totalorder %s15, 8
      // Predicated region
      $region17: #{mhsa_pallas.1} parent=5 // pred_check
        %p223 = pneg %p222
      $region18: #{mhsa_pallas.1} parent=5 // pred_check_branch
        %225 = sbr.rel (%p223) target = $region20
      $region19: #{mhsa_pallas.1} parent=5 // pred_region
        // Predicated region
        $region21: #{mhsa_pallas.1} parent=19 // pred_check
          %p226 = pneg %p47
        $region22: #{mhsa_pallas.1} parent=19 // pred_check_branch
          %228 = sbr.rel (%p226) target = $region24
        $region23: #{mhsa_pallas.1} parent=19 // pred_region
          %p229 = scmp.lt.s32.totalorder %s22, 1
          %s230 = scalar_select %p229, %s22, 1
          %s231 = smul.addr %s230, 2
          %s232 = smul.addr %s231, 8
          %s233 = scalar_lea.vmem %s0, %s232
        $region24: #{mhsa_pallas.1} parent=19 // pred_fallthru
          _
        // Predicated region
        $region25: #{mhsa_pallas.1} parent=19 // pred_check
          %p234 = pneg %p73
        $region26: #{mhsa_pallas.1} parent=19 // pred_check_branch
          %236 = sbr.rel (%p234) target = $region28
        $region27: #{mhsa_pallas.1} parent=19 // pred_region
          %p237 = scmp.lt.s32.totalorder %s23, 3
          %s238 = scalar_select %p237, %s23, 3
          %s239 = smul.addr %s238, 4
          %s240 = smul.addr %s239, 8
          %s241 = scalar_lea.vmem %s1, %s240
        $region28: #{mhsa_pallas.1} parent=19 // pred_fallthru
          _
        // Predicated region
        $region29: #{mhsa_pallas.1} parent=19 // pred_check
          %p242 = pneg %p99
        $region30: #{mhsa_pallas.1} parent=19 // pred_check_branch
          %244 = sbr.rel (%p242) target = $region32
        $region31: #{mhsa_pallas.1} parent=19 // pred_region
          %p245 = scmp.lt.s32.totalorder %s23, 3
          %s246 = scalar_select %p245, %s23, 3
          %s247 = smul.addr %s246, 4
          %s248 = smul.addr %s247, 8
          %s249 = scalar_lea.vmem %s2, %s248
        $region32: #{mhsa_pallas.1} parent=19 // pred_fallthru
          _
        // Predicated region
        $region33: #{mhsa_pallas.1} parent=19 // pred_check
          %p250 = pneg %p125
        $region34: #{mhsa_pallas.1} parent=19 // pred_check_branch
          %252 = sbr.rel (%p250) target = $region36
        $region35: #{mhsa_pallas.1} parent=19 // pred_region
          %p253 = scmp.lt.s32.totalorder %s23, 3
          %s254 = scalar_select %p253, %s23, 3
          %s255 = smul.addr %s254, 4
          %s256 = smul.addr %s255, 8
          %s257 = scalar_lea.vmem %s3, %s256
        $region36: #{mhsa_pallas.1} parent=19 // pred_fallthru
          _
        // Predicated region
        $region37: #{mhsa_pallas.1} parent=19 // pred_check
          %p258 = pneg %p151
        $region38: #{mhsa_pallas.1} parent=19 // pred_check_branch
          %260 = sbr.rel (%p258) target = $region40
        $region39: #{mhsa_pallas.1} parent=19 // pred_region
          %p261 = scmp.lt.s32.totalorder %s23, 3
          %s262 = scalar_select %p261, %s23, 3
          %s263 = smul.addr %s262, 8
          %s264 = scalar_lea.vmem %s4, %s263
        $region40: #{mhsa_pallas.1} parent=19 // pred_fallthru
          _
      $region20: #{mhsa_pallas.1} parent=5 // pred_fallthru
        _
      %p265 = scmp.le.s32.totalorder 1, %s15
      %p266 = scmp.lt.s32.totalorder %s15, 9
      %p267 = pnand %p265, %p266
      %p268 = pneg %p267
      // Predicated region
      $region41: #{mhsa_pallas.1} parent=5 // pred_check
        _
      $region42: #{mhsa_pallas.1} parent=5 // pred_check_branch
        %270 = sbr.rel (%p267) target = $region44
      $region43: #{mhsa_pallas.1} parent=5 // pred_region
        %s271 = ssub.s32 %s15, 1
        %p272 = scmp.lt.s32.totalorder %s24, 1
        %s273 = scalar_select %p272, %s24, 1
        %s274 = smul.addr %s273, 2
        %s275 = smul.addr %s274, 8
        %s276 = scalar_lea.vmem %s0, %s275
        %p277 = pneg %p53
        %p278 = pneg %p50
        %p279 = scmp.lt.s32.totalorder %s25, 3
        %s280 = scalar_select %p279, %s25, 3
        %s281 = smul.addr %s280, 4
        %s282 = smul.addr %s281, 8
        %s283 = scalar_lea.vmem %s1, %s282
        %p284 = pneg %p79
        %p285 = pneg %p76
        %p286 = scmp.lt.s32.totalorder %s25, 3
        %s287 = scalar_select %p286, %s25, 3
        %s288 = smul.addr %s287, 4
        %s289 = smul.addr %s288, 8
        %s290 = scalar_lea.vmem %s2, %s289
        %p291 = pneg %p105
        %p292 = pneg %p102
        %p293 = scmp.lt.s32.totalorder %s25, 3
        %s294 = scalar_select %p293, %s25, 3
        %s295 = smul.addr %s294, 4
        %s296 = smul.addr %s295, 8
        %s297 = scalar_lea.vmem %s3, %s296
        %p298 = pneg %p131
        %p299 = pneg %p128
        %p300 = scmp.lt.s32.totalorder %s25, 3
        %s301 = scalar_select %p300, %s25, 3
        %s302 = smul.addr %s301, 8
        %s303 = scalar_lea.vmem %s4, %s302
        %p304 = pneg %p157
        %p305 = pneg %p154
        %p306 = pneg %p178
        %p307 = pneg %p175
        %p308 = pneg %p204
        %p309 = pneg %p201
        %s310 = sand.u32 %s191, 1
        %s311 = scalar_lea.sflag [#allocation4], %s310
        %s312 = sand.u32 %s191, 1
        %s313 = smul.addr %s312, 16
        %s314 = scalar_lea.vmem [#allocation3], %s313
        %p315 = scmp.lt.s32.totalorder %s24, 1
        %s316 = scalar_select %p315, %s24, 1
        %s317 = smul.addr %s316, 2
        %s318 = smul.addr %s317, 8
        %s319 = scalar_lea.vmem %s0, %s318
        %p320 = scmp.lt.s32.totalorder %s25, 3
        %s321 = scalar_select %p320, %s25, 3
        %s322 = smul.addr %s321, 4
        %s323 = smul.addr %s322, 8
        %s324 = scalar_lea.vmem %s1, %s323
        %p325 = scmp.lt.s32.totalorder %s25, 3
        %s326 = scalar_select %p325, %s25, 3
        %s327 = smul.addr %s326, 4
        %s328 = smul.addr %s327, 8
        %s329 = scalar_lea.vmem %s2, %s328
        %p330 = scmp.lt.s32.totalorder %s25, 3
        %s331 = scalar_select %p330, %s25, 3
        %s332 = smul.addr %s331, 4
        %s333 = smul.addr %s332, 8
        %s334 = scalar_lea.vmem %s3, %s333
        %p335 = scmp.lt.s32.totalorder %s25, 3
        %s336 = scalar_select %p335, %s25, 3
        %s337 = smul.addr %s336, 8
        %s338 = scalar_lea.vmem %s4, %s337
        %p339 = scmp.eq.s32.totalorder %s25, 0
        // Predicated region
        $region45: #{mhsa_pallas.1} parent=43 // pred_check
          %p340 = pneg %p339
        $region46: #{mhsa_pallas.1} parent=43 // pred_check_branch
          %342 = sbr.rel (%p340) target = $region48
        $region47: #{mhsa_pallas.1} parent=43 // pred_region
          %vm343 = vcmask 261120
          %344 = vst.msk [vmem:[#allocation2] sm:$0xff] %vm343, 0.0
          %345 = vst.msk [vmem:[#allocation2 + $0x8] sm:$0xff] %vm343, 0.0
        $region48: #{mhsa_pallas.1} parent=43 // pred_fallthru
          _
        %v346 = vld [vmem:[%s319] sm:$0xff]
        %v347 = vld [vmem:[%s319 + $0x8] sm:$0xff]
        %v348 = vld [vmem:[%s324] sm:$0xff]
        %v349 = vld [vmem:[%s324 + $0x8] sm:$0xff]
        %v350 = vld [vmem:[%s324 + $0x10] sm:$0xff]
        %v351 = vld [vmem:[%s324 + $0x18] sm:$0xff]
        %vm352 = vcmask 261120
        %v354 = vsel %vm352, %v346, 0
        %v357 = vsel %vm352, %v347, 0
        %359 = vmatprep.subr.mxu0 0.0
        %360 = vmatpush1.msra.mxu0 %v348
        %361 = vmatprep.subr.mxu0 0.0
        %362 = vmatpush1.msra.mxu0 %v349
        %363 = vmatprep.subr.mxu0 0.0
        %364 = vmatpush1.msra.mxu0 %v350
        %365 = vmatprep.subr.mxu0 0.0
        %366 = vmatpush1.msra.mxu0 %v351
        %367 = vmatprep.subr.mxu0 0.0
        %368 = vmatpush1.msra.mxu0 0.0
        %369 = vmatprep.subr.mxu0 0.0
        %370 = vmatpush1.msra.mxu0 0.0
        %371 = vmatprep.subr.mxu0 0.0
        %372 = vmatpush1.msra.mxu0 0.0
        %373 = vmatprep.subr.mxu0 0.0
        %374 = vmatpush1.msra.mxu0 0.0
        %375 = vmatprep.subr.mxu0 0.0
        %376 = vmatpush1.msra.mxu0 0.0
        %377 = vmatprep.subr.mxu0 0.0
        %378 = vmatpush1.msra.mxu0 0.0
        %379 = vmatprep.subr.mxu0 0.0
        %380 = vmatpush1.msra.mxu0 0.0
        %381 = vmatprep.subr.mxu0 0.0
        %382 = vmatpush1.msra.mxu0 0.0
        %383 = vmatprep.subr.mxu0 0.0
        %384 = vmatpush1.msra.mxu0 0.0
        %385 = vmatprep.subr.mxu0 0.0
        %386 = vmatpush1.msra.mxu0 0.0
        %387 = vmatprep.subr.mxu0 0.0
        %388 = vmatpush1.msra.mxu0 0.0
        %389 = vmatprep.subr.mxu0 0.0
        %390 = vmatpush1.msra.mxu0 0.0
        %391 = vmatprep.subr.mxu0 0.0
        %392 = vmatpush1.msra.mxu0 0.0
        %393 = vmatprep.subr.mxu0 0.0
        %394 = vmatpush1.msra.mxu0 0.0
        %395 = vmatprep.subr.mxu0 0.0
        %396 = vmatpush1.msra.mxu0 0.0
        %397 = vmatprep.subr.mxu0 0.0
        %398 = vmatpush1.msra.mxu0 0.0
        %399 = vmatprep.subr.mxu0 0.0
        %400 = vmatpush1.msra.mxu0 0.0
        %401 = vmatprep.subr.mxu0 0.0
        %402 = vmatpush1.msra.mxu0 0.0
        %403 = vmatprep.subr.mxu0 0.0
        %404 = vmatpush1.msra.mxu0 0.0
        %405 = vmatprep.subr.mxu0 0.0
        %406 = vmatpush1.msra.mxu0 0.0
        %407 = vmatprep.subr.mxu0 0.0
        %408 = vmatpush1.msra.mxu0 0.0
        %409 = vmatprep.subr.mxu0 0.0
        %410 = vmatpush1.msra.mxu0 0.0
        %411 = vmatprep.subr.mxu0 0.0
        %412 = vmatpush1.msra.mxu0 0.0
        %413 = vmatprep.subr.mxu0 0.0
        %414 = vmatpush1.msra.mxu0 0.0
        %415 = vmatprep.subr.mxu0 0.0
        %416 = vmatpush1.msra.mxu0 0.0
        %417 = vmatprep.subr.mxu0 0.0
        %418 = vmatpush1.msra.mxu0 0.0
        %419 = vmatprep.subr.mxu0 0.0
        %420 = vmatpush1.msra.mxu0 0.0
        %421 = vmatprep.subr.mxu0 0.0
        %422 = vmatpush1.msra.mxu0 0.0
        %423 = vmatprep.mubr.f32.mxu0 0.0
        %424 = vmatmul.mubr.f32.gmra.mrb[0].mxu0 %v354
        %v425 = vpop.f32.mrb[0].mxu0
        %v426 = vadd.f32 0.0, %v425
        %v427 = vpop.f32.mrb[0].mxu0
        %428 = vmatprep.mubr.f32.mxu0 0.0
        %429 = vmatmul.mubr.f32.gmra.mrb[0].mxu0 %v357
        %v430 = vpop.f32.mrb[0].mxu0
        %v431 = vadd.f32 0.0, %v430
        %v432 = vpop.f32.mrb[0].mxu0
        %433 = vdwg.mxu0
        %v434 = vld [vmem:[%s329] sm:$0xff]
        %v435 = vld [vmem:[%s329 + $0x8] sm:$0xff]
        %v436 = vld [vmem:[%s329 + $0x10] sm:$0xff]
        %v437 = vld [vmem:[%s329 + $0x18] sm:$0xff]
        %438 = vmatprep.subr.mxu0 0.0
        %439 = vmatpush1.msra.mxu0 %v434
        %440 = vmatprep.subr.mxu0 0.0
        %441 = vmatpush1.msra.mxu0 %v435
        %442 = vmatprep.subr.mxu0 0.0
        %443 = vmatpush1.msra.mxu0 %v436
        %444 = vmatprep.subr.mxu0 0.0
        %445 = vmatpush1.msra.mxu0 %v437
        %446 = vmatprep.subr.mxu0 0.0
        %447 = vmatpush1.msra.mxu0 0.0
        %448 = vmatprep.subr.mxu0 0.0
        %449 = vmatpush1.msra.mxu0 0.0
        %450 = vmatprep.subr.mxu0 0.0
        %451 = vmatpush1.msra.mxu0 0.0
        %452 = vmatprep.subr.mxu0 0.0
        %453 = vmatpush1.msra.mxu0 0.0
        %454 = vmatprep.subr.mxu0 0.0
        %455 = vmatpush1.msra.mxu0 0.0
        %456 = vmatprep.subr.mxu0 0.0
        %457 = vmatpush1.msra.mxu0 0.0
        %458 = vmatprep.subr.mxu0 0.0
        %459 = vmatpush1.msra.mxu0 0.0
        %460 = vmatprep.subr.mxu0 0.0
        %461 = vmatpush1.msra.mxu0 0.0
        %462 = vmatprep.subr.mxu0 0.0
        %463 = vmatpush1.msra.mxu0 0.0
        %464 = vmatprep.subr.mxu0 0.0
        %465 = vmatpush1.msra.mxu0 0.0
        %466 = vmatprep.subr.mxu0 0.0
        %467 = vmatpush1.msra.mxu0 0.0
        %468 = vmatprep.subr.mxu0 0.0
        %469 = vmatpush1.msra.mxu0 0.0
        %470 = vmatprep.subr.mxu0 0.0
        %471 = vmatpush1.msra.mxu0 0.0
        %472 = vmatprep.subr.mxu0 0.0
        %473 = vmatpush1.msra.mxu0 0.0
        %474 = vmatprep.subr.mxu0 0.0
        %475 = vmatpush1.msra.mxu0 0.0
        %476 = vmatprep.subr.mxu0 0.0
        %477 = vmatpush1.msra.mxu0 0.0
        %478 = vmatprep.subr.mxu0 0.0
        %479 = vmatpush1.msra.mxu0 0.0
        %480 = vmatprep.subr.mxu0 0.0
        %481 = vmatpush1.msra.mxu0 0.0
        %482 = vmatprep.subr.mxu0 0.0
        %483 = vmatpush1.msra.mxu0 0.0
        %484 = vmatprep.subr.mxu0 0.0
        %485 = vmatpush1.msra.mxu0 0.0
        %486 = vmatprep.subr.mxu0 0.0
        %487 = vmatpush1.msra.mxu0 0.0
        %488 = vmatprep.subr.mxu0 0.0
        %489 = vmatpush1.msra.mxu0 0.0
        %490 = vmatprep.subr.mxu0 0.0
        %491 = vmatpush1.msra.mxu0 0.0
        %492 = vmatprep.subr.mxu0 0.0
        %493 = vmatpush1.msra.mxu0 0.0
        %494 = vmatprep.subr.mxu0 0.0
        %495 = vmatpush1.msra.mxu0 0.0
        %496 = vmatprep.subr.mxu0 0.0
        %497 = vmatpush1.msra.mxu0 0.0
        %498 = vmatprep.subr.mxu0 0.0
        %499 = vmatpush1.msra.mxu0 0.0
        %500 = vmatprep.subr.mxu0 0.0
        %501 = vmatpush1.msra.mxu0 0.0
        %502 = vmatprep.mubr.f32.mxu0 0.0
        %503 = vmatmul.mubr.f32.gmra.mrb[0].mxu0 %v354
        %v504 = vpop.f32.mrb[0].mxu0
        %v505 = vadd.f32 0.0, %v504
        %v506 = vpop.f32.mrb[0].mxu0
        %507 = vmatprep.mubr.f32.mxu0 0.0
        %508 = vmatmul.mubr.f32.gmra.mrb[0].mxu0 %v357
        %v509 = vpop.f32.mrb[0].mxu0
        %v510 = vadd.f32 0.0, %v509
        %v511 = vpop.f32.mrb[0].mxu0
        %512 = vdwg.mxu0
        %v513 = vld [vmem:[%s334] sm:$0xff]
        %v514 = vld [vmem:[%s334 + $0x8] sm:$0xff]
        %v515 = vld [vmem:[%s334 + $0x10] sm:$0xff]
        %v516 = vld [vmem:[%s334 + $0x18] sm:$0xff]
        %517 = vmatprep.subr.mxu0 0.0
        %518 = vmatpush1.msra.mxu0 %v513
        %519 = vmatprep.subr.mxu0 0.0
        %520 = vmatpush1.msra.mxu0 %v514
        %521 = vmatprep.subr.mxu0 0.0
        %522 = vmatpush1.msra.mxu0 %v515
        %523 = vmatprep.subr.mxu0 0.0
        %524 = vmatpush1.msra.mxu0 %v516
        %525 = vmatprep.subr.mxu0 0.0
        %526 = vmatpush1.msra.mxu0 0.0
        %527 = vmatprep.subr.mxu0 0.0
        %528 = vmatpush1.msra.mxu0 0.0
        %529 = vmatprep.subr.mxu0 0.0
        %530 = vmatpush1.msra.mxu0 0.0
        %531 = vmatprep.subr.mxu0 0.0
        %532 = vmatpush1.msra.mxu0 0.0
        %533 = vmatprep.subr.mxu0 0.0
        %534 = vmatpush1.msra.mxu0 0.0
        %535 = vmatprep.subr.mxu0 0.0
        %536 = vmatpush1.msra.mxu0 0.0
        %537 = vmatprep.subr.mxu0 0.0
        %538 = vmatpush1.msra.mxu0 0.0
        %539 = vmatprep.subr.mxu0 0.0
        %540 = vmatpush1.msra.mxu0 0.0
        %541 = vmatprep.subr.mxu0 0.0
        %542 = vmatpush1.msra.mxu0 0.0
        %543 = vmatprep.subr.mxu0 0.0
        %544 = vmatpush1.msra.mxu0 0.0
        %545 = vmatprep.subr.mxu0 0.0
        %546 = vmatpush1.msra.mxu0 0.0
        %547 = vmatprep.subr.mxu0 0.0
        %548 = vmatpush1.msra.mxu0 0.0
        %549 = vmatprep.subr.mxu0 0.0
        %550 = vmatpush1.msra.mxu0 0.0
        %551 = vmatprep.subr.mxu0 0.0
        %552 = vmatpush1.msra.mxu0 0.0
        %553 = vmatprep.subr.mxu0 0.0
        %554 = vmatpush1.msra.mxu0 0.0
        %555 = vmatprep.subr.mxu0 0.0
        %556 = vmatpush1.msra.mxu0 0.0
        %557 = vmatprep.subr.mxu0 0.0
        %558 = vmatpush1.msra.mxu0 0.0
        %559 = vmatprep.subr.mxu0 0.0
        %560 = vmatpush1.msra.mxu0 0.0
        %561 = vmatprep.subr.mxu0 0.0
        %562 = vmatpush1.msra.mxu0 0.0
        %563 = vmatprep.subr.mxu0 0.0
        %564 = vmatpush1.msra.mxu0 0.0
        %565 = vmatprep.subr.mxu0 0.0
        %566 = vmatpush1.msra.mxu0 0.0
        %567 = vmatprep.subr.mxu0 0.0
        %568 = vmatpush1.msra.mxu0 0.0
        %569 = vmatprep.subr.mxu0 0.0
        %570 = vmatpush1.msra.mxu0 0.0
        %571 = vmatprep.subr.mxu0 0.0
        %572 = vmatpush1.msra.mxu0 0.0
        %573 = vmatprep.subr.mxu0 0.0
        %574 = vmatpush1.msra.mxu0 0.0
        %575 = vmatprep.subr.mxu0 0.0
        %576 = vmatpush1.msra.mxu0 0.0
        %577 = vmatprep.subr.mxu0 0.0
        %578 = vmatpush1.msra.mxu0 0.0
        %579 = vmatprep.subr.mxu0 0.0
        %580 = vmatpush1.msra.mxu0 0.0
        %581 = vmatprep.mubr.f32.mxu0 0.0
        %582 = vmatmul.mubr.f32.gmra.mrb[0].mxu0 %v354
        %v583 = vpop.f32.mrb[0].mxu0
        %v584 = vadd.f32 0.0, %v583
        %v585 = vpop.f32.mrb[0].mxu0
        %586 = vmatprep.mubr.f32.mxu0 0.0
        %587 = vmatmul.mubr.f32.gmra.mrb[0].mxu0 %v357
        %v588 = vpop.f32.mrb[0].mxu0
        %v589 = vadd.f32 0.0, %v588
        %v590 = vpop.f32.mrb[0].mxu0
        %591 = vdwg.mxu0
        %vm592 = vcmask 64512
        %v594 = vsel %vm592, %v426, 0
        %v597 = vsel %vm592, %v431, 0
        %v600 = vsel %vm592, %v505, 0
        %v603 = vsel %vm592, %v510, 0
        %605 = vmatprep.subr.mxu0 0.0
        %606 = vmatpush1.xpose.msra.mxu0 %v600
        %607 = vmatprep.subr.mxu0 0.0
        %608 = vmatpush1.xpose.msra.mxu0 %v603
        %609 = vmatprep.subr.mxu0 0.0
        %610 = vmatpush1.xpose.msra.mxu0 0.0
        %611 = vmatprep.subr.mxu0 0.0
        %612 = vmatpush1.xpose.msra.mxu0 0.0
        %613 = vmatprep.subr.mxu0 0.0
        %614 = vmatpush1.xpose.msra.mxu0 0.0
        %615 = vmatprep.subr.mxu0 0.0
        %616 = vmatpush1.xpose.msra.mxu0 0.0
        %617 = vmatprep.subr.mxu0 0.0
        %618 = vmatpush1.xpose.msra.mxu0 0.0
        %619 = vmatprep.subr.mxu0 0.0
        %620 = vmatpush1.xpose.msra.mxu0 0.0
        %621 = vmatprep.subr.mxu0 0.0
        %622 = vmatpush1.xpose.msra.mxu0 0.0
        %623 = vmatprep.subr.mxu0 0.0
        %624 = vmatpush1.xpose.msra.mxu0 0.0
        %625 = vmatprep.subr.mxu0 0.0
        %626 = vmatpush1.xpose.msra.mxu0 0.0
        %627 = vmatprep.subr.mxu0 0.0
        %628 = vmatpush1.xpose.msra.mxu0 0.0
        %629 = vmatprep.subr.mxu0 0.0
        %630 = vmatpush1.xpose.msra.mxu0 0.0
        %631 = vmatprep.subr.mxu0 0.0
        %632 = vmatpush1.xpose.msra.mxu0 0.0
        %633 = vmatprep.subr.mxu0 0.0
        %634 = vmatpush1.xpose.msra.mxu0 0.0
        %635 = vmatprep.subr.mxu0 0.0
        %636 = vmatpush1.xpose.msra.mxu0 0.0
        %637 = vmatprep.subr.mxu0 0.0
        %638 = vmatpush1.xpose.msra.mxu0 0.0
        %639 = vmatprep.subr.mxu0 0.0
        %640 = vmatpush1.xpose.msra.mxu0 0.0
        %641 = vmatprep.subr.mxu0 0.0
        %642 = vmatpush1.xpose.msra.mxu0 0.0
        %643 = vmatprep.subr.mxu0 0.0
        %644 = vmatpush1.xpose.msra.mxu0 0.0
        %645 = vmatprep.subr.mxu0 0.0
        %646 = vmatpush1.xpose.msra.mxu0 0.0
        %647 = vmatprep.subr.mxu0 0.0
        %648 = vmatpush1.xpose.msra.mxu0 0.0
        %649 = vmatprep.subr.mxu0 0.0
        %650 = vmatpush1.xpose.msra.mxu0 0.0
        %651 = vmatprep.subr.mxu0 0.0
        %652 = vmatpush1.xpose.msra.mxu0 0.0
        %653 = vmatprep.subr.mxu0 0.0
        %654 = vmatpush1.xpose.msra.mxu0 0.0
        %655 = vmatprep.subr.mxu0 0.0
        %656 = vmatpush1.xpose.msra.mxu0 0.0
        %657 = vmatprep.subr.mxu0 0.0
        %658 = vmatpush1.xpose.msra.mxu0 0.0
        %659 = vmatprep.subr.mxu0 0.0
        %660 = vmatpush1.xpose.msra.mxu0 0.0
        %661 = vmatprep.subr.mxu0 0.0
        %662 = vmatpush1.xpose.msra.mxu0 0.0
        %663 = vmatprep.subr.mxu0 0.0
        %664 = vmatpush1.xpose.msra.mxu0 0.0
        %665 = vmatprep.subr.mxu0 0.0
        %666 = vmatpush1.xpose.msra.mxu0 0.0
        %667 = vmatprep.subr.mxu0 0.0
        %668 = vmatpush1.xpose.msra.mxu0 0.0
        %669 = vmatprep.mubr.f32.mxu0 0.0
        %670 = vmatmul.mubr.f32.gmra.mrb[0].mxu0 %v594
        %v671 = vpop.f32.mrb[0].mxu0
        %v672 = vadd.f32 0.0, %v671
        %v673 = vpop.f32.mrb[0].mxu0
        %674 = vmatprep.mubr.f32.mxu0 0.0
        %675 = vmatmul.mubr.f32.gmra.mrb[0].mxu0 %v597
        %v676 = vpop.f32.mrb[0].mxu0
        %v677 = vadd.f32 0.0, %v676
        %v678 = vpop.f32.mrb[0].mxu0
        %679 = vdwg.mxu0
        %v680 = vmul.f32 %v672, 0.35355338
        %v681 = vmul.f32 %v677, 0.35355338
        %vm682 = vcmask 130048
        %v683 = vsel %vm682, %v680, -inf
        %684 = vmax.xlane.f32.xlu0 %v683
        %v685 = vpop.xlane.xlu0 %684
        %v686 = vsel %vm682, %v681, -inf
        %687 = vmax.xlane.f32.xlu0 %v686
        %v688 = vpop.xlane.xlu0 %687
        %v689 = vsub.f32 %v680, %v685
        %v690 = vsub.f32 %v681, %v688
        %v691 = vmul.f32 %v689, 1.442695
        %v692 = vpow.pop %v691
        %v693 = vmul.f32 %v690, 1.442695
        %v694 = vpow.pop %v693
        %v695 = vsel %vm682, %v692, 0.0
        %696 = vadd.xlane.f32.xlu0 %v695
        %v697 = vpop.xlane.xlu0 %696
        %v698 = vsel %vm682, %v694, 0.0
        %699 = vadd.xlane.f32.xlu0 %v698
        %v700 = vpop.xlane.xlu0 %699
        %v701 = vrcp.pop %v697
        %v702 = vmul.f32 %v692, %v701
        %v703 = vrcp.pop %v700
        %v704 = vmul.f32 %v694, %v703
        %v706 = vsel %vm682, %v702, 0
        %v709 = vsel %vm682, %v704, 0
        %711 = vmatprep.subr.mxu0 0.0
        %712 = vmatpush1.msra.mxu0 %v584
        %713 = vmatprep.subr.mxu0 0.0
        %714 = vmatpush1.msra.mxu0 %v589
        %715 = vmatprep.subr.mxu0 0.0
        %716 = vmatpush1.msra.mxu0 0.0
        %717 = vmatprep.subr.mxu0 0.0
        %718 = vmatpush1.msra.mxu0 0.0
        %719 = vmatprep.subr.mxu0 0.0
        %720 = vmatpush1.msra.mxu0 0.0
        %721 = vmatprep.subr.mxu0 0.0
        %722 = vmatpush1.msra.mxu0 0.0
        %723 = vmatprep.subr.mxu0 0.0
        %724 = vmatpush1.msra.mxu0 0.0
        %725 = vmatprep.subr.mxu0 0.0
        %726 = vmatpush1.msra.mxu0 0.0
        %727 = vmatprep.subr.mxu0 0.0
        %728 = vmatpush1.msra.mxu0 0.0
        %729 = vmatprep.subr.mxu0 0.0
        %730 = vmatpush1.msra.mxu0 0.0
        %731 = vmatprep.subr.mxu0 0.0
        %732 = vmatpush1.msra.mxu0 0.0
        %733 = vmatprep.subr.mxu0 0.0
        %734 = vmatpush1.msra.mxu0 0.0
        %735 = vmatprep.subr.mxu0 0.0
        %736 = vmatpush1.msra.mxu0 0.0
        %737 = vmatprep.subr.mxu0 0.0
        %738 = vmatpush1.msra.mxu0 0.0
        %739 = vmatprep.subr.mxu0 0.0
        %740 = vmatpush1.msra.mxu0 0.0
        %741 = vmatprep.subr.mxu0 0.0
        %742 = vmatpush1.msra.mxu0 0.0
        %743 = vmatprep.subr.mxu0 0.0
        %744 = vmatpush1.msra.mxu0 0.0
        %745 = vmatprep.subr.mxu0 0.0
        %746 = vmatpush1.msra.mxu0 0.0
        %747 = vmatprep.subr.mxu0 0.0
        %748 = vmatpush1.msra.mxu0 0.0
        %749 = vmatprep.subr.mxu0 0.0
        %750 = vmatpush1.msra.mxu0 0.0
        %751 = vmatprep.subr.mxu0 0.0
        %752 = vmatpush1.msra.mxu0 0.0
        %753 = vmatprep.subr.mxu0 0.0
        %754 = vmatpush1.msra.mxu0 0.0
        %755 = vmatprep.subr.mxu0 0.0
        %756 = vmatpush1.msra.mxu0 0.0
        %757 = vmatprep.subr.mxu0 0.0
        %758 = vmatpush1.msra.mxu0 0.0
        %759 = vmatprep.subr.mxu0 0.0
        %760 = vmatpush1.msra.mxu0 0.0
        %761 = vmatprep.subr.mxu0 0.0
        %762 = vmatpush1.msra.mxu0 0.0
        %763 = vmatprep.subr.mxu0 0.0
        %764 = vmatpush1.msra.mxu0 0.0
        %765 = vmatprep.subr.mxu0 0.0
        %766 = vmatpush1.msra.mxu0 0.0
        %767 = vmatprep.subr.mxu0 0.0
        %768 = vmatpush1.msra.mxu0 0.0
        %769 = vmatprep.subr.mxu0 0.0
        %770 = vmatpush1.msra.mxu0 0.0
        %771 = vmatprep.subr.mxu0 0.0
        %772 = vmatpush1.msra.mxu0 0.0
        %773 = vmatprep.subr.mxu0 0.0
        %774 = vmatpush1.msra.mxu0 0.0
        %775 = vmatprep.mubr.f32.mxu0 0.0
        %776 = vmatmul.mubr.f32.gmra.mrb[0].mxu0 %v706
        %v777 = vpop.f32.mrb[0].mxu0
        %v778 = vadd.f32 0.0, %v777
        %v779 = vpop.f32.mrb[0].mxu0
        %780 = vmatprep.mubr.f32.mxu0 0.0
        %781 = vmatmul.mubr.f32.gmra.mrb[0].mxu0 %v709
        %v782 = vpop.f32.mrb[0].mxu0
        %v783 = vadd.f32 0.0, %v782
        %v784 = vpop.f32.mrb[0].mxu0
        %785 = vdwg.mxu0
        %v786 = vld [vmem:[%s338] sm:$0xff]
        %v788 = vsel %vm592, %v778, 0
        %v791 = vsel %vm592, %v783, 0
        %793 = vmatprep.subr.mxu0 0.0
        %794 = vmatpush1.msra.mxu0 %v786
        %795 = vmatprep.subr.mxu0 0.0
        %796 = vmatpush1.msra.mxu0 0.0
        %797 = vmatprep.subr.mxu0 0.0
        %798 = vmatpush1.msra.mxu0 0.0
        %799 = vmatprep.subr.mxu0 0.0
        %800 = vmatpush1.msra.mxu0 0.0
        %801 = vmatprep.subr.mxu0 0.0
        %802 = vmatpush1.msra.mxu0 0.0
        %803 = vmatprep.subr.mxu0 0.0
        %804 = vmatpush1.msra.mxu0 0.0
        %805 = vmatprep.subr.mxu0 0.0
        %806 = vmatpush1.msra.mxu0 0.0
        %807 = vmatprep.subr.mxu0 0.0
        %808 = vmatpush1.msra.mxu0 0.0
        %809 = vmatprep.subr.mxu0 0.0
        %810 = vmatpush1.msra.mxu0 0.0
        %811 = vmatprep.subr.mxu0 0.0
        %812 = vmatpush1.msra.mxu0 0.0
        %813 = vmatprep.subr.mxu0 0.0
        %814 = vmatpush1.msra.mxu0 0.0
        %815 = vmatprep.subr.mxu0 0.0
        %816 = vmatpush1.msra.mxu0 0.0
        %817 = vmatprep.subr.mxu0 0.0
        %818 = vmatpush1.msra.mxu0 0.0
        %819 = vmatprep.subr.mxu0 0.0
        %820 = vmatpush1.msra.mxu0 0.0
        %821 = vmatprep.subr.mxu0 0.0
        %822 = vmatpush1.msra.mxu0 0.0
        %823 = vmatprep.subr.mxu0 0.0
        %824 = vmatpush1.msra.mxu0 0.0
        %825 = vmatprep.subr.mxu0 0.0
        %826 = vmatpush1.msra.mxu0 0.0
        %827 = vmatprep.subr.mxu0 0.0
        %828 = vmatpush1.msra.mxu0 0.0
        %829 = vmatprep.subr.mxu0 0.0
        %830 = vmatpush1.msra.mxu0 0.0
        %831 = vmatprep.subr.mxu0 0.0
        %832 = vmatpush1.msra.mxu0 0.0
        %833 = vmatprep.subr.mxu0 0.0
        %834 = vmatpush1.msra.mxu0 0.0
        %835 = vmatprep.subr.mxu0 0.0
        %836 = vmatpush1.msra.mxu0 0.0
        %837 = vmatprep.subr.mxu0 0.0
        %838 = vmatpush1.msra.mxu0 0.0
        %839 = vmatprep.subr.mxu0 0.0
        %840 = vmatpush1.msra.mxu0 0.0
        %841 = vmatprep.subr.mxu0 0.0
        %842 = vmatpush1.msra.mxu0 0.0
        %843 = vmatprep.subr.mxu0 0.0
        %844 = vmatpush1.msra.mxu0 0.0
        %845 = vmatprep.subr.mxu0 0.0
        %846 = vmatpush1.msra.mxu0 0.0
        %847 = vmatprep.subr.mxu0 0.0
        %848 = vmatpush1.msra.mxu0 0.0
        %849 = vmatprep.subr.mxu0 0.0
        %850 = vmatpush1.msra.mxu0 0.0
        %851 = vmatprep.subr.mxu0 0.0
        %852 = vmatpush1.msra.mxu0 0.0
        %853 = vmatprep.subr.mxu0 0.0
        %854 = vmatpush1.msra.mxu0 0.0
        %855 = vmatprep.subr.mxu0 0.0
        %856 = vmatpush1.msra.mxu0 0.0
        %857 = vmatprep.mubr.f32.mxu0 0.0
        %858 = vmatmul.mubr.f32.gmra.mrb[0].mxu0 %v788
        %v859 = vpop.f32.mrb[0].mxu0
        %v860 = vadd.f32 0.0, %v859
        %v861 = vpop.f32.mrb[0].mxu0
        %862 = vmatprep.mubr.f32.mxu0 0.0
        %863 = vmatmul.mubr.f32.gmra.mrb[0].mxu0 %v791
        %v864 = vpop.f32.mrb[0].mxu0
        %v865 = vadd.f32 0.0, %v864
        %v866 = vpop.f32.mrb[0].mxu0
        %867 = vdwg.mxu0
        %v868 = vld [vmem:[#allocation2] sm:$0xff]
        %v869 = vld [vmem:[#allocation2 + $0x8] sm:$0xff]
        %v870 = vadd.f32 %v868, %v860
        %v871 = vadd.f32 %v869, %v865
        %872 = vst.msk [vmem:[#allocation2] sm:$0xff] %vm352, %v870
        %873 = vst.msk [vmem:[#allocation2 + $0x8] sm:$0xff] %vm352, %v871
        %p874 = scmp.eq.s32.totalorder %s25, 3
        // Predicated region
        $region49: #{mhsa_pallas.1} parent=43 // pred_check
          %p875 = pneg %p874
        $region50: #{mhsa_pallas.1} parent=43 // pred_check_branch
          %877 = sbr.rel (%p875) target = $region52
        $region51: #{mhsa_pallas.1} parent=43 // pred_region
          %v878 = vld [vmem:[#allocation2] sm:$0xff]
          %v879 = vld [vmem:[#allocation2 + $0x8] sm:$0xff]
          %v880 = vld [vmem:[%s5] sm:$0x1]
          %v882 = vlaneseq
          %v883 = vshrl.u32 %v882, 7
          %v884 = vsub.s32 0, %v883
          %v885 = vrot.slane %v880, %v884
          %v887 = vadd.f32 %v878, %v885
          %v888 = vadd.f32 %v879, %v885
          %889 = vst.msk [vmem:[%s314] sm:$0xff] %vm352, %v887
          %890 = vst.msk [vmem:[%s314 + $0x8] sm:$0xff] %vm352, %v888
        $region52: #{mhsa_pallas.1} parent=43 // pred_fallthru
          _
        %s891 = sand.u32 %s191, 1
        %s892 = scalar_lea.sflag [#allocation4], %s891
        %s893 = sand.u32 %s191, 1
        %s894 = smul.addr %s893, 16
        %s895 = scalar_lea.vmem [#allocation3], %s894
        // Predicated region
        $region53: #{mhsa_pallas.1} parent=43 // pred_check
          %p896 = pneg %p201
        $region54: #{mhsa_pallas.1} parent=43 // pred_check_branch
          %898 = sbr.rel (%p896) target = $region56
        $region55: #{mhsa_pallas.1} parent=43 // pred_region
          %s900 = ssub.s32 256, 256
          %901 = vsyncadd %s892, %s900
          %s902 = smul.addr %s24, 2
          %s903 = smul.addr %s902, 128
          %s904 = scalar_lea.hbm %s6, %s903
          %s905 = sshll.u32 %s895, 4
          %s906 = int_to_ptr.vmem [resolvable:$true] %s905
          %911 = dma.vmem_to_hbm [thread:$0]  %s906, 256, %s904, %s892, 128, 128, 8
        $region56: #{mhsa_pallas.1} parent=43 // pred_fallthru
          _
      $region44: #{mhsa_pallas.1} parent=5 // pred_fallthru
        _
      %p912 = scmp.le.s32.totalorder 2, %s15
      // Predicated region
      $region57: #{mhsa_pallas.1} parent=5 // pred_check
        %p913 = pneg %p912
      $region58: #{mhsa_pallas.1} parent=5 // pred_check_branch
        %915 = sbr.rel (%p913) target = $region60
      $region59: #{mhsa_pallas.1} parent=5 // pred_region
        %s916 = ssub.s32 %s15, 2
        // Predicated region
        $region61: #{mhsa_pallas.1} parent=59 // pred_check
          %p917 = pneg %p207
        $region62: #{mhsa_pallas.1} parent=59 // pred_check_branch
          %919 = sbr.rel (%p917) target = $region64
        $region63: #{mhsa_pallas.1} parent=59 // pred_region
          %s920 = sand.u32 %s192, 1
          %s921 = scalar_lea.sflag [#allocation4], %s920
          %s922 = sand.u32 %s192, 1
          %s923 = smul.addr %s922, 16
          %s924 = scalar_lea.vmem [#allocation3], %s923
          %925 = dma.done %s921, 256
        $region64: #{mhsa_pallas.1} parent=59 // pred_fallthru
          _
      $region60: #{mhsa_pallas.1} parent=5 // pred_fallthru
        _
    $region6: #{mhsa_pallas.1} parent=1 // loop_footer
      %s19 = sadd.s32 1, %s15
    $region7: #{mhsa_pallas.1} parent=1 // loop_footer_branch
      %14 = sbr.rel target = $region3
    $region8: #{mhsa_pallas.1} parent=1 // loop_exit
      _
    %926 = vsyncpa [#allocation4], 1
    %s927 = scalar_lea.sflag [#allocation4], 1
    %928 = vsyncpa %s927, 1

</llo_original>
